<compile_context>
chip_gen: v6e
topology: v6e:2x2x1
jax: 0.10.0
libtpu: 0.0.40
codegen_flags: <defaults>
</compile_context>

<pallas_src>
import functools
import math

import numpy as np
import jax
import jax.numpy as jnp
from jax.experimental import pallas as pl
from jax.experimental.pallas import tpu as pltpu


# --------------------------------------------------------------------------
# RCA (Zero_Parameter) + transposed anomaly map, one pallas_call per layer
# --------------------------------------------------------------------------

def _rca_kernel(temp_ref, ft_ref, fs_ref, wl_ref, wq_ref, bq_ref, amap_ref,
                *, num_heads, scale):
    """Per batch b: project+norm F_s (bf16 x bf16 -> f32 acc), multi-head attn update
    of F_t via per-head lane slices (no head-major relayout), residual + norm, then
    amap = exp(temp) * F_t_a @ F_s^T  -> (N1, N2), lane-dense in N2."""
    ft = ft_ref[0]                                   # (N1, Ct) f32
    # F_s = linear_proj[k](F_s); F_s /= ||F_s||   (bf16 operands, f32 accumulate; rsqrt -> EUP)
    fs = jnp.dot(fs_ref[0], wl_ref[...], preferred_element_type=jnp.float32)        # (N2, Ct)
    fs = fs * jax.lax.rsqrt(jnp.sum(fs * fs, axis=-1, keepdims=True))
    # q_t = Conv1d(k=1)(F_t) == F_t @ Wq + bq
    q = jnp.dot(ft.astype(jnp.bfloat16), wq_ref[...],
                preferred_element_type=jnp.float32) + bq_ref[...]                   # (N1, Ct)
    n1, ct = q.shape
    hd = ct // num_heads
    heads = []
    for h in range(num_heads):                       # static unroll; attention is tiny
        sl = slice(h * hd, (h + 1) * hd)
        qh = q[:, sl]                                # (N1, hd)
        kh = fs[:, sl]                               # (N2, hd)   (k_s == v_s)
        attn = jax.lax.dot_general(qh, kh, (((1,), (1,)), ((), ())),
                                   preferred_element_type=jnp.float32) * scale      # (N1, N2)
        attn = jax.nn.softmax(attn, axis=-1)
        heads.append(jnp.dot(attn, kh, preferred_element_type=jnp.float32))         # (N1, hd)
    ft_a = jnp.concatenate(heads, axis=-1) + ft      # residual (f32)
    ft_a = ft_a * jax.lax.rsqrt(jnp.sum(ft_a * ft_a, axis=-1, keepdims=True))
    # transposed anomaly map; exp(temp) pre-folded into temp_ref (hoisted in wrapper).
    # Kept in f32: only N1 (~4) rows of MXU work, negligible next to the projection GEMM.
    amap = temp_ref[0] * jax.lax.dot_general(
        ft_a, fs, (((1,), (1,)), ((), ())), preferred_element_type=jnp.float32)     # (N1, N2)
    amap_ref[0] = amap.astype(amap_ref.dtype)


def rca_anomaly_layer(exp_temp_pixel, F_t, pt_bf16, Wl_bf16, Wq_bf16, bq, num_heads):
    """F_t (B,N1,Ct) f32, pt_bf16 (B,N2,Dv) bf16, Wl (Dv,Ct) bf16 -> amap (B,N1,N2) f32."""
    B, N1, Ct = F_t.shape
    _, N2, Dv = pt_bf16.shape
    scale = float(Ct) ** (-0.5)                      # matches reference (dim_out ** -0.5)
    kern = functools.partial(_rca_kernel, num_heads=num_heads, scale=scale)
    return pl.pallas_call(
        kern,
        out_shape=jax.ShapeDtypeStruct((B, N1, N2), jnp.float32),
        grid=(B,),
        in_specs=[
            pl.BlockSpec(memory_space=pltpu.MemorySpace.SMEM),       # exp(temp_pixel)
            pl.BlockSpec((1, N1, Ct), lambda b: (b, 0, 0)),           # F_t (f32)
            pl.BlockSpec((1, N2, Dv), lambda b: (b, 0, 0)),           # patch tokens (bf16)
            pl.BlockSpec((Dv, Ct), lambda b: (0, 0)),                 # W_l (bf16, constant)
            pl.BlockSpec((Ct, Ct), lambda b: (0, 0)),                 # W_q (bf16, constant)
            pl.BlockSpec((1, Ct), lambda b: (0, 0)),                  # b_q (f32)
        ],
        out_specs=pl.BlockSpec((1, N1, N2), lambda b: (b, 0, 0)),
        compiler_params=pltpu.CompilerParams(dimension_semantics=("parallel",)),
    )(exp_temp_pixel, F_t, pt_bf16, Wl_bf16, Wq_bf16, bq)


# --------------------------------------------------------------------------
# Head kernels: class_mapping + norm, image embedding (Global_Feature fuse), pro_img
# --------------------------------------------------------------------------

def _head1_kernel(temp_ref, tf_ref, img_ref, cw_ref, cb_ref, pro_ref):
    tf = tf_ref[0]                                   # (P, C)
    img = img_ref[0]                                 # (1, C)
    te = jnp.dot(tf, cw_ref[...], preferred_element_type=jnp.float32) + cb_ref[...]
    te = te * jax.lax.rsqrt(jnp.sum(te * te, axis=-1, keepdims=True))
    ie = img * jax.lax.rsqrt(jnp.sum(img * img, axis=-1, keepdims=True))
    pro = temp_ref[0] * jax.lax.dot_general(ie, te, (((1,), (1,)), ((), ())),
                                            preferred_element_type=jnp.float32)     # (1, P)
    pro_ref[0] = pro.astype(pro_ref.dtype)


def head_stage1(exp_temp_image, text_features, image_features, cw, cb):
    B, P, C = text_features.shape
    return pl.pallas_call(
        _head1_kernel,
        out_shape=jax.ShapeDtypeStruct((B, 1, P), jnp.float32),
        grid=(B,),
        in_specs=[
            pl.BlockSpec(memory_space=pltpu.MemorySpace.SMEM),
            pl.BlockSpec((1, P, C), lambda b: (b, 0, 0)),
            pl.BlockSpec((1, 1, C), lambda b: (b, 0, 0)),
            pl.BlockSpec((C, C), lambda b: (0, 0)),
            pl.BlockSpec((1, C), lambda b: (0, 0)),
        ],
        out_specs=pl.BlockSpec((1, 1, P), lambda b: (b, 0, 0)),
        compiler_params=pltpu.CompilerParams(dimension_semantics=("parallel",)),
    )(exp_temp_image, text_features, image_features.reshape(B, 1, C), cw, cb)


def _head2_kernel(*refs, K):
    """Global_Feature fuse (lane-dense token attention) -> image_mapping + norm
    -> class_mapping + norm -> pro_img (1, P) lane-dense."""
    temp_ref, tf_ref, img_ref = refs[:3]
    pt_refs = refs[3:3 + K]                          # K x (1, N, Dv) bf16
    w1_refs = refs[3 + K:3 + 2 * K]                  # K x (Dv, DH) bf16
    (b1_ref, fcwT_ref, fcb_ref, fpw_ref, fpb_ref,
     cw_ref, cb_ref, iw_ref, ib_ref, pro_ref) = refs[3 + 2 * K:]
    tf = tf_ref[0]                                   # (P, C)
    img = img_ref[0]                                 # (1, C)
    # h = concat_k(pt_k) @ W1 + b1  ==  sum_k pt_k @ W1_k + b1   (bf16 x bf16 -> f32)
    acc = jnp.dot(pt_refs[0][0], w1_refs[0][...], preferred_element_type=jnp.float32)
    for k in range(1, K):
        acc = acc + jnp.dot(pt_refs[k][0], w1_refs[k][...],
                            preferred_element_type=jnp.float32)
    h = acc + b1_ref[...]                                                            # (N, DH)
    # lane-dense token scores: (1,DH) x (N,DH)^T -> (1,N) on the MXU
    t = jax.lax.dot_general(fcwT_ref[...], h, (((1,), (1,)), ((), ())),
                            preferred_element_type=jnp.float32) + fcb_ref[...]       # (1, N)
    a = jax.nn.softmax(t, axis=-1)                   # softmax over tokens (lane axis)
    g = jnp.dot(a, h, preferred_element_type=jnp.float32)                            # (1, DH)
    fused = jnp.dot(g, fpw_ref[...], preferred_element_type=jnp.float32) + fpb_ref[...]
    ie = jnp.dot(img + fused, iw_ref[...], preferred_element_type=jnp.float32) + ib_ref[...]
    ie = ie * jax.lax.rsqrt(jnp.sum(ie * ie, axis=-1, keepdims=True))
    te = jnp.dot(tf, cw_ref[...], preferred_element_type=jnp.float32) + cb_ref[...]
    te = te * jax.lax.rsqrt(jnp.sum(te * te, axis=-1, keepdims=True))
    pro = temp_ref[0] * jax.lax.dot_general(ie, te, (((1,), (1,)), ((), ())),
                                            preferred_element_type=jnp.float32)     # (1, P)
    pro_ref[0] = pro.astype(pro_ref.dtype)


def head_stage2(exp_temp_image, text_features, image_features, pt_bf16_list, params):
    B, P, C = text_features.shape
    K = len(pt_bf16_list)
    _, N, DV = pt_bf16_list[0].shape
    DH = params['fuse_w1'].shape[1]
    # split fuse_w1 by layer (no concat of the big activations needed)
    w1_slices = [params['fuse_w1'][k * DV:(k + 1) * DV].astype(jnp.bfloat16) for k in range(K)]
    fcwT = jnp.transpose(params['fuse_wc'])          # (1, DH) for lane-dense scores
    in_specs = (
        [pl.BlockSpec(memory_space=pltpu.MemorySpace.SMEM),
         pl.BlockSpec((1, P, C), lambda b: (b, 0, 0)),
         pl.BlockSpec((1, 1, C), lambda b: (b, 0, 0))]
        + [pl.BlockSpec((1, N, DV), lambda b: (b, 0, 0)) for _ in range(K)]
        + [pl.BlockSpec((DV, DH), lambda b: (0, 0)) for _ in range(K)]
        + [pl.BlockSpec((1, DH), lambda b: (0, 0)),     # fuse_b1
           pl.BlockSpec((1, DH), lambda b: (0, 0)),     # fuse_wc^T
           pl.BlockSpec((1, 1), lambda b: (0, 0)),      # fuse_bc
           pl.BlockSpec((DH, C), lambda b: (0, 0)),     # fuse_wp
           pl.BlockSpec((1, C), lambda b: (0, 0)),      # fuse_bp
           pl.BlockSpec((C, C), lambda b: (0, 0)),      # class_w
           pl.BlockSpec((1, C), lambda b: (0, 0)),      # class_b
           pl.BlockSpec((C, C), lambda b: (0, 0)),      # img_w
           pl.BlockSpec((1, C), lambda b: (0, 0))])     # img_b
    args = ([exp_temp_image, text_features, image_features.reshape(B, 1, C)]
            + list(pt_bf16_list) + w1_slices
            + [params['fuse_b1'], fcwT, params['fuse_bc'],
               params['fuse_wp'], params['fuse_bp'],
               params['class_w'], params['class_b'],
               params['img_w'], params['img_b']])
    # TODO(synk): at production N~1369, K*Dv~2048 set vmem_limit_bytes explicitly (v5e default
    # scoped VMEM is 16 MiB) or tile N with an 'arbitrary' accumulation axis.
    return pl.pallas_call(
        functools.partial(_head2_kernel, K=K),
        out_shape=jax.ShapeDtypeStruct((B, 1, P), jnp.float32),
        grid=(B,),
        in_specs=in_specs,
        out_specs=pl.BlockSpec((1, 1, P), lambda b: (b, 0, 0)),
        compiler_params=pltpu.CompilerParams(dimension_semantics=("parallel",)),
    )(*args)


# --------------------------------------------------------------------------
# Bilinear upsample (align_corners=True) as separable interpolation matmuls.
# --------------------------------------------------------------------------

def _interp_matrix(in_size, out_size):
    """M (out_size, in_size): out = M @ in  == 1-D align_corners bilinear resample."""
    if in_size == 1:
        return np.ones((out_size, 1), np.float32)
    if out_size == 1:
        m = np.zeros((1, in_size), np.float32)
        m[0, 0] = 1.0
        return m
    src = np.arange(out_size, dtype=np.float64) * (in_size - 1) / (out_size - 1)
    lo = np.clip(np.floor(src).astype(np.int64), 0, in_size - 1)
    hi = np.minimum(lo + 1, in_size - 1)
    w = (src - lo).astype(np.float32)
    m = np.zeros((out_size, in_size), np.float32)
    rows = np.arange(out_size)
    m[rows, lo] += (1.0 - w)
    m[rows, hi] += w
    return m


# gather-based version kept ONLY for the pure-JAX reference check
def bilinear_resize_align_corners(x, out_h, out_w):
    B, C, H, W = x.shape
    ys = jnp.linspace(0.0, H - 1.0, out_h) if H > 1 else jnp.zeros((out_h,), jnp.float32)
    xs = jnp.linspace(0.0, W - 1.0, out_w) if W > 1 else jnp.zeros((out_w,), jnp.float32)
    y0 = jnp.clip(jnp.floor(ys), 0, H - 1).astype(jnp.int32)
    y1 = jnp.minimum(y0 + 1, H - 1)
    x0 = jnp.clip(jnp.floor(xs), 0, W - 1).astype(jnp.int32)
    x1 = jnp.minimum(x0 + 1, W - 1)
    wy = (ys - y0.astype(jnp.float32))[None, None, :, None]
    wx = (xs - x0.astype(jnp.float32))[None, None, None, :]
    top, bot = x[:, :, y0, :], x[:, :, y1, :]
    rows = top * (1.0 - wy) + bot * wy
    left, right = rows[:, :, :, x0], rows[:, :, :, x1]
    return left * (1.0 - wx) + right * wx


# --------------------------------------------------------------------------
# Context_Prompting.forward (mode='train')
# --------------------------------------------------------------------------

def context_prompting_forward(params, text_features, image_features, patch_tokens,
                              stage, image_size, num_heads=4):
    B, P, C = text_features.shape
    # hoist exp(temperature) out of the kernels (scalar done once, lives in SMEM)
    exp_temp_image = jnp.exp(params['temp_image'])
    exp_temp_pixel = jnp.exp(params['temp_pixel'])
    # bf16 copies of the big activations (halves DMA/VMEM for the GEMM-bound kernels)
    pt_bf16 = [p.astype(jnp.bfloat16) for p in patch_tokens]

    if stage == 1:
        pro3 = head_stage1(exp_temp_image, text_features, image_features,
                           params['class_w'], params['class_b'])
    else:
        pro3 = head_stage2(exp_temp_image, text_features, image_features,
                           pt_bf16, params)
    pro_img = jnp.transpose(pro3, (0, 2, 1))         # (B, P, 1)

    Wq_bf = params['rca_wq'].astype(jnp.bfloat16)
    amaps = []
    for k, pt in enumerate(pt_bf16):
        Wl_bf = params['rca_wl'][k].astype(jnp.bfloat16)
        amap = rca_anomaly_layer(exp_temp_pixel, text_features, pt, Wl_bf,
                                 Wq_bf, params['rca_bq'], num_heads)     # (B, P, N2)
        N2 = amap.shape[-1]
        H = int(math.isqrt(N2))
        Ry = jnp.asarray(_interp_matrix(H, image_size))                  # (S, H)
        a4 = amap.reshape(B, P, H, H)
        # separable align_corners bilinear upsample: contract w first, then h (both MXU)
        rows = jnp.einsum('bphw,sw->bphs', a4, Ry)
        amaps.append(jnp.einsum('rh,bphs->bprs', Ry, rows))              # (B, P, S, S)
    return pro_img, amaps


# --------------------------------------------------------------------------
# Pure-JAX reference (for correctness check)
# --------------------------------------------------------------------------

def reference_forward(params, text_features, image_features, patch_tokens,
                      stage, image_size, num_heads=4):
    B, P, C = text_features.shape
    te = text_features @ params['class_w'] + params['class_b'][0]
    te = te / jnp.linalg.norm(te, axis=-1, keepdims=True)
    if stage == 1:
        ie = image_features / jnp.linalg.norm(image_features, axis=-1, keepdims=True)
    else:
        x = jnp.concatenate(patch_tokens, axis=2)
        h = x @ params['fuse_w1'] + params['fuse_b1'][0]
        t = h @ params['fuse_wc'] + params['fuse_bc'][0]
        a = jax.nn.softmax(t, axis=1)
        g = jnp.sum(a * h, axis=1)
        fused = g @ params['fuse_wp'] + params['fuse_bp'][0]
        ie = (image_features + fused) @ params['img_w'] + params['img_b'][0]
        ie = ie / jnp.linalg.norm(ie, axis=-1, keepdims=True)
    pro_img = jnp.exp(params['temp_image'][0]) * jnp.einsum('bpc,bc->bp', te, ie)[..., None]

    hd = C // num_heads
    scale = float(C) ** (-0.5)
    amaps = []
    for layer, pt in enumerate(patch_tokens):
        fs = pt @ params['rca_wl'][layer]
        fs = fs / jnp.linalg.norm(fs, axis=-1, keepdims=True)
        q = text_features @ params['rca_wq'] + params['rca_bq'][0]
        qh = q.reshape(B, P, num_heads, hd)
        kh = fs.reshape(B, fs.shape[1], num_heads, hd)
        attn = jnp.einsum('bnkc,bmkc->bknm', qh, kh) * scale
        attn = jax.nn.softmax(attn, axis=-1)
        fta = jnp.einsum('bknm,bmkc->bnkc', attn, kh).reshape(B, P, C) + text_features
        fta = fta / jnp.linalg.norm(fta, axis=-1, keepdims=True)
        amap = jnp.exp(params['temp_pixel'][0]) * jnp.einsum('bmc,bnc->bmn', fs, fta)
        N2 = amap.shape[1]
        H = int(math.isqrt(N2))
        amap = jnp.transpose(amap, (0, 2, 1)).reshape(B, P, H, H)
        amaps.append(bilinear_resize_align_corners(amap, image_size, image_size))
    return pro_img, amaps


# --------------------------------------------------------------------------

if __name__ == "__main__":
    key = jax.random.PRNGKey(0)
    B = 2
    C = 32            # text_width == embed_dim == dim_out
    DV = 64           # vision_width (dim_v)
    DH = DV // 2      # fuse hidden
    K = 2             # len(args.features_list)
    PROMPT_NUM = 2
    P = PROMPT_NUM * 2
    N2 = 16           # patch tokens per layer (H = 4)
    IMG = 8           # args.image_size
    NUM_HEADS = 4

    keys = jax.random.split(key, 16)
    params = {
        # weights stored transposed (in, out) for right-multiplication; init ~ N(0, 0.02), biases 0
        'class_w': 0.02 * jax.random.normal(keys[0], (C, C), jnp.float32),
        'class_b': jnp.zeros((1, C), jnp.float32),
        'img_w': 0.02 * jax.random.normal(keys[1], (C, C), jnp.float32),
        'img_b': jnp.zeros((1, C), jnp.float32),
        'temp_pixel': jnp.full((1,), np.log(1.0 / 0.07), jnp.float32),
        'temp_image': jnp.full((1,), np.log(1.0 / 0.07), jnp.float32),
        'fuse_w1': 0.02 * jax.random.normal(keys[2], (K * DV, DH), jnp.float32),
        'fuse_b1': jnp.zeros((1, DH), jnp.float32),
        'fuse_wc': 0.02 * jax.random.normal(keys[3], (DH, 1), jnp.float32),
        'fuse_bc': jnp.zeros((1, 1), jnp.float32),
        'fuse_wp': 0.02 * jax.random.normal(keys[4], (DH, C), jnp.float32),
        'fuse_bp': jnp.zeros((1, C), jnp.float32),
        'rca_wl': [0.02 * jax.random.normal(keys[5 + i], (DV, C), jnp.float32) for i in range(K)],
        'rca_wq': 0.02 * jax.random.normal(keys[7], (C, C), jnp.float32),
        'rca_bq': jnp.zeros((1, C), jnp.float32),
    }

    text_features = jax.random.normal(keys[10], (B, P, C), jnp.float32)
    image_features = jax.random.normal(keys[11], (B, C), jnp.float32)
    patch_tokens = [jax.random.normal(keys[12 + i], (B, N2, DV), jnp.float32) for i in range(K)]

    for stage in (1, 2):
        pro_img, amaps = context_prompting_forward(
            params, text_features, image_features, patch_tokens,
            stage=stage, image_size=IMG, num_heads=NUM_HEADS)
        pro_ref, amaps_ref = reference_forward(
            params, text_features, image_features, patch_tokens,
            stage=stage, image_size=IMG, num_heads=NUM_HEADS)

        jax.block_until_ready(pro_img)
        for a in amaps:
            jax.block_until_ready(a)

        # pro_img has no / negligible bf16 in its path; amaps go through bf16 GEMMs.
        np.testing.assert_allclose(np.asarray(pro_img), np.asarray(pro_ref),
                                   rtol=3e-2, atol=3e-2)
        for a, r in zip(amaps, amaps_ref):
            np.testing.assert_allclose(np.asarray(a), np.asarray(r),
                                       rtol=5e-2, atol=8e-2)
        assert pro_img.shape == (B, P, 1)
        assert all(a.shape == (B, P, IMG, IMG) for a in amaps)

    print("KERNEL_OK")
</pallas_src>

<mosaic_0001>
module attributes {stable_mosaic.version = 11 : i64} {
  func.func @_head1_kernel(%arg0: i32, %arg1: memref<1xf32, #tpu.memory_space<smem>>, %arg2: memref<1x4x32xf32, #tpu.memory_space<vmem>>, %arg3: memref<1x1x32xf32, #tpu.memory_space<vmem>>, %arg4: memref<32x32xf32, #tpu.memory_space<vmem>>, %arg5: memref<1x32xf32, #tpu.memory_space<vmem>>, %arg6: memref<1x1x4xf32, #tpu.memory_space<vmem>>) attributes {dimension_semantics = [#tpu.dimension_semantics<parallel>], iteration_bounds = array<i64: 2>, scalar_prefetch = 0 : i64, scratch_operands = 0 : i64, tpu.core_type = #tpu.core_type<tc>, window_params = [{transform_indices = @transform_0, window_bounds = array<i64: 1>}, {transform_indices = @transform_1, window_bounds = array<i64: 1, 4, 32>}, {transform_indices = @transform_2, window_bounds = array<i64: 1, 1, 32>}, {pipeline_mode = #tpu.pipeline_mode<synchronous>, transform_indices = @transform_3, window_bounds = array<i64: 32, 32>}, {pipeline_mode = #tpu.pipeline_mode<synchronous>, transform_indices = @transform_4, window_bounds = array<i64: 1, 32>}, {transform_indices = @transform_5, window_bounds = array<i64: 1, 1, 4>}]} {
    %c0 = arith.constant 0 : index
    %c0_0 = arith.constant 0 : index
    %c0_1 = arith.constant 0 : index
    %0 = vector.load %arg2[%c0, %c0_0, %c0_1] : memref<1x4x32xf32, #tpu.memory_space<vmem>>, vector<1x4x32xf32>
    %1 = vector.shape_cast %0 : vector<1x4x32xf32> to vector<4x32xf32>
    %c0_2 = arith.constant 0 : index
    %c0_3 = arith.constant 0 : index
    %c0_4 = arith.constant 0 : index
    %2 = vector.load %arg3[%c0_2, %c0_3, %c0_4] : memref<1x1x32xf32, #tpu.memory_space<vmem>>, vector<1x1x32xf32>
    %3 = vector.shape_cast %2 : vector<1x1x32xf32> to vector<1x32xf32>
    %c0_5 = arith.constant 0 : index
    %c0_6 = arith.constant 0 : index
    %4 = vector.load %arg4[%c0_5, %c0_6] : memref<32x32xf32, #tpu.memory_space<vmem>>, vector<32x32xf32>
    %cst = arith.constant dense<0.000000e+00> : vector<4x32xf32>
    %5 = tpu.matmul %1, %4, %cst {dimension_numbers = #tpu.dot_dimension_numbers<[1], [0], [0], [1], [0, 0, 1, 1], [], []>} : vector<4x32xf32>, vector<32x32xf32>, vector<4x32xf32> -> vector<4x32xf32>
    %c0_7 = arith.constant 0 : index
    %c0_8 = arith.constant 0 : index
    %6 = vector.load %arg5[%c0_7, %c0_8] : memref<1x32xf32, #tpu.memory_space<vmem>>, vector<1x32xf32>
    %7 = vector.broadcast %6 : vector<1x32xf32> to vector<4x32xf32>
    %8 = arith.addf %5, %7 : vector<4x32xf32>
    %9 = arith.mulf %8, %8 : vector<4x32xf32>
    %cst_9 = arith.constant dense<0.000000e+00> : vector<4xf32>
    %10 = vector.multi_reduction <add>, %9, %cst_9 [1] : vector<4x32xf32> to vector<4xf32>
    %11 = vector.shape_cast %10 : vector<4xf32> to vector<4x1xf32>
    %12 = math.rsqrt %11 : vector<4x1xf32>
    %13 = vector.broadcast %12 : vector<4x1xf32> to vector<4x32xf32>
    %14 = arith.mulf %8, %13 : vector<4x32xf32>
    %15 = arith.mulf %3, %3 : vector<1x32xf32>
    %cst_10 = arith.constant dense<0.000000e+00> : vector<1xf32>
    %16 = vector.multi_reduction <add>, %15, %cst_10 [1] : vector<1x32xf32> to vector<1xf32>
    %17 = vector.shape_cast %16 : vector<1xf32> to vector<1x1xf32>
    %18 = math.rsqrt %17 : vector<1x1xf32>
    %19 = vector.broadcast %18 : vector<1x1xf32> to vector<1x32xf32>
    %20 = arith.mulf %3, %19 : vector<1x32xf32>
    %c0_11 = arith.constant 0 : index
    %21 = memref.load %arg1[%c0_11] : memref<1xf32, #tpu.memory_space<smem>>
    %cst_12 = arith.constant dense<0.000000e+00> : vector<1x4xf32>
    %22 = tpu.matmul %20, %14, %cst_12 {dimension_numbers = #tpu.dot_dimension_numbers<[1], [1], [0], [0], [0, 0, 1, 0], [], []>} : vector<1x32xf32>, vector<4x32xf32>, vector<1x4xf32> -> vector<1x4xf32>
    %23 = vector.broadcast %21 : f32 to vector<1x4xf32>
    %24 = arith.mulf %23, %22 : vector<1x4xf32>
    %c0_13 = arith.constant 0 : index
    %c0_14 = arith.constant 0 : index
    %c0_15 = arith.constant 0 : index
    %25 = vector.load %arg6[%c0_13, %c0_14, %c0_15] : memref<1x1x4xf32, #tpu.memory_space<vmem>>, vector<1x1x4xf32>
    %26 = vector.shape_cast %25 : vector<1x1x4xf32> to vector<1x4xf32>
    %27 = vector.shape_cast %24 : vector<1x4xf32> to vector<1x1x4xf32>
    tpu.vector_store %arg6[%c0_13, %c0_14, %c0_15], %27 {strides = array<i32>} : memref<1x1x4xf32, #tpu.memory_space<vmem>>, vector<1x1x4xf32>,
    return
  }
  func.func @transform_0(%arg0: i32) -> i32 {
    %c0_i32 = arith.constant 0 : i32
    %c0_i32_0 = arith.constant 0 : i32
    return %c0_i32 : i32
  }
  func.func @transform_1(%arg0: i32) -> (i32, i32, i32) {
    %c0_i32 = arith.constant 0 : i32
    %c0_i32_0 = arith.constant 0 : i32
    %c0_i32_1 = arith.constant 0 : i32
    return %arg0, %c0_i32, %c0_i32_0 : i32, i32, i32
  }
  func.func @transform_2(%arg0: i32) -> (i32, i32, i32) {
    %c0_i32 = arith.constant 0 : i32
    %c0_i32_0 = arith.constant 0 : i32
    %c0_i32_1 = arith.constant 0 : i32
    return %arg0, %c0_i32, %c0_i32_0 : i32, i32, i32
  }
  func.func @transform_3(%arg0: i32) -> (i32, i32) {
    %c0_i32 = arith.constant 0 : i32
    %c0_i32_0 = arith.constant 0 : i32
    %c0_i32_1 = arith.constant 0 : i32
    return %c0_i32, %c0_i32_0 : i32, i32
  }
  func.func @transform_4(%arg0: i32) -> (i32, i32) {
    %c0_i32 = arith.constant 0 : i32
    %c0_i32_0 = arith.constant 0 : i32
    %c0_i32_1 = arith.constant 0 : i32
    return %c0_i32, %c0_i32_0 : i32, i32
  }
  func.func @transform_5(%arg0: i32) -> (i32, i32, i32) {
    %c0_i32 = arith.constant 0 : i32
    %c0_i32_0 = arith.constant 0 : i32
    %c0_i32_1 = arith.constant 0 : i32
    return %arg0, %c0_i32, %c0_i32_0 : i32, i32, i32
  }
}

</mosaic_0001>

<llo_original>
// kernel: tpu_custom_call.1
$region0: #{tpu_custom_call.1}
  #allocation0 [shape = 'u32[]', space=smem, size = 0x4, offset = 0x4, fixed_abs, tag = 'smem constant byte address 0x4 - core index']
  #allocation1 [shape = 'u32[144,128]{1,0:T(1,128)}', space=vmem, size = 0x12000, scoped, tag = 'internal scratch']
  #allocation2 [shape = 'f32[1]{0:T(128)S(6)}', space=smem, size = 0x200, scoped, tag = 'scoped memory for tpu_custom_call.1']
  %s0 = inlined_call_operand.<no memory space> [shape: f32[1], index: 0, kind: input, shape index: {}]
  %s1 = inlined_call_operand.hbm [shape: f32[2,4,32], index: 1, kind: input, shape index: {}]
  %s2 = inlined_call_operand.vmem [shape: f32[2,1,32], index: 2, kind: input, shape index: {}]
  %s3 = inlined_call_operand.hbm [shape: f32[32,32], index: 3, kind: input, shape index: {}]
  %s4 = inlined_call_operand.vmem [shape: f32[1,32], index: 4, kind: input, shape index: {}]
  %s5 = inlined_call_operand.hbm [shape: f32[2,1,4], index: 5, kind: output, shape index: {}]
  %s6 = sld [smem:[#allocation0]]
  $region61: #{tpu_custom_call.1} parent=0
    _
  %s8 = ssub.s32 1, %s6
  %s9 = scalar_select 0, %s8, %s6
  %10 = sst [smem:[#allocation2]] %s0
  $region1: #{tpu_custom_call.1} parent=0
    #allocation3 [shape = 'u8[4096]{0}', space=vmem, size = 0x1000, scoped, tag = 'input window, operand 1']
    #allocation4 [shape = 's32[2]{0}', space=sflag, size = 0x8, scoped, tag = 'scoped memory for tpu_custom_call.1']
    #allocation5 [shape = 's32[2]{0}', space=sflag, size = 0x8, scoped, tag = 'scoped memory for tpu_custom_call.1']
    #allocation6 [shape = 'u8[16384]{0}', space=vmem, size = 0x4000, scoped, tag = 'input window, operand 3, single buffered']
    #allocation7 [shape = 's32[1]{0}', space=sflag, size = 0x4, scoped, tag = 'scoped memory for tpu_custom_call.1']
    #allocation8 [shape = 'u8[1024]{0}', space=vmem, size = 0x400, scoped, tag = 'output window, operand 0']
    %11 = vsyncpa [#allocation4], 0
    %s12 = scalar_lea.sflag [#allocation4], 1
    %13 = vsyncpa %s12, 0
    %14 = vsyncpa [#allocation7], 0
    %15 = vsyncpa [#allocation5], 0
    %s16 = scalar_lea.sflag [#allocation5], 1
    %17 = vsyncpa %s16, 0
    loop: start=0, step=1, limit=4
    $region2: #{tpu_custom_call.1} parent=1 // loop_pre_header
      _
    $region3: #{tpu_custom_call.1} parent=1 // loop_header
      %s19 = sphi 0, %s23
      %p20 = scmp.ge.s32.totalorder %s19, 4
      %s27 = sphi 0, %s27
      %s29 = sphi 0, %s27
      %s30 = sphi 0, %s29
      %s44 = sphi 0, %s30
      %s50 = sphi 0, %s52
      %s53 = sphi 0, %s50
      %s54 = sphi 0, %s53
      %s70 = sphi 0, %s54
      %s76 = sphi 0, %s78
      %s79 = sphi 0, %s76
      %s80 = sphi 0, %s79
      %s96 = sphi 0, %s80
      %s100 = sphi 0, %s100
      %s102 = sphi 0, %s100
      %s103 = sphi 0, %s102
      %s117 = sphi 0, %s103
      %s121 = sphi 0, %s121
      %s123 = sphi 0, %s121
      %s124 = sphi 0, %s123
      %s138 = sphi 0, %s124
      %s144 = sphi 0, %s146
      %s147 = sphi 0, %s144
      %s148 = sphi 0, %s147
      %s164 = sphi 0, %s148
    $region4: #{tpu_custom_call.1} parent=1 // loop_header_branch
      %22 = sbr.rel (%p20) target = $region8
    $region5: #{tpu_custom_call.1} parent=1 // loop_body
      %s24 = ssub.s32 %s19, 1
      %s25 = ssub.s32 %s19, 2
      %s26 = sadd.s32 %s19, 1
      %s28 = sadd.s32 %s27, 1
      %p31 = scmp.eq.s32.totalorder %s19, 1
      %p32 = scmp.ne.s32.totalorder %s27, %s29
      %p33 = scmp.eq.s32.totalorder %s19, 0
      %p34 = por %p32, %p33
      %p35 = scmp.ne.s32.totalorder %s27, %s29
      %p36 = scmp.eq.s32.totalorder %s24, 1
      %p37 = por %p35, %p36
      %p38 = scmp.ne.s32.totalorder %s29, %s30
      %p39 = scmp.eq.s32.totalorder %s24, 0
      %p40 = por %p38, %p39
      %p41 = scmp.ne.s32.totalorder %s29, %s30
      %p42 = scmp.eq.s32.totalorder %s25, 1
      %p43 = por %p41, %p42
      %p45 = scmp.ne.s32.totalorder %s30, %s44
      %p46 = scmp.eq.s32.totalorder %s25, 0
      %p47 = por %p45, %p46
      %s48 = ssub.s32 %s19, %s26
      %p49 = scmp.eq.s32.totalorder %s48, 0
      %s51 = sadd.s32 %s50, 1
      %s52 = scalar_select %p49, %s50, %s51
      %p55 = pneg %p49
      %p56 = scmp.eq.s32.totalorder %s19, 1
      %p57 = por %p55, %p56
      %p58 = scmp.ne.s32.totalorder %s50, %s53
      %p59 = scmp.eq.s32.totalorder %s19, 0
      %p60 = por %p58, %p59
      %p61 = scmp.ne.s32.totalorder %s50, %s53
      %p62 = scmp.eq.s32.totalorder %s24, 1
      %p63 = por %p61, %p62
      %p64 = scmp.ne.s32.totalorder %s53, %s54
      %p65 = scmp.eq.s32.totalorder %s24, 0
      %p66 = por %p64, %p65
      %p67 = scmp.ne.s32.totalorder %s53, %s54
      %p68 = scmp.eq.s32.totalorder %s25, 1
      %p69 = por %p67, %p68
      %p71 = scmp.ne.s32.totalorder %s54, %s70
      %p72 = scmp.eq.s32.totalorder %s25, 0
      %p73 = por %p71, %p72
      %s74 = ssub.s32 %s19, %s26
      %p75 = scmp.eq.s32.totalorder %s74, 0
      %s77 = sadd.s32 %s76, 1
      %s78 = scalar_select %p75, %s76, %s77
      %p81 = pneg %p75
      %p82 = scmp.eq.s32.totalorder %s19, 1
      %p83 = por %p81, %p82
      %p84 = scmp.ne.s32.totalorder %s76, %s79
      %p85 = scmp.eq.s32.totalorder %s19, 0
      %p86 = por %p84, %p85
      %p87 = scmp.ne.s32.totalorder %s76, %s79
      %p88 = scmp.eq.s32.totalorder %s24, 1
      %p89 = por %p87, %p88
      %p90 = scmp.ne.s32.totalorder %s79, %s80
      %p91 = scmp.eq.s32.totalorder %s24, 0
      %p92 = por %p90, %p91
      %p93 = scmp.ne.s32.totalorder %s79, %s80
      %p94 = scmp.eq.s32.totalorder %s25, 1
      %p95 = por %p93, %p94
      %p97 = scmp.ne.s32.totalorder %s80, %s96
      %p98 = scmp.eq.s32.totalorder %s25, 0
      %p99 = por %p97, %p98
      %s101 = sadd.s32 %s100, 1
      %p104 = scmp.eq.s32.totalorder %s19, 1
      %p105 = scmp.ne.s32.totalorder %s100, %s102
      %p106 = scmp.eq.s32.totalorder %s19, 0
      %p107 = por %p105, %p106
      %p108 = scmp.ne.s32.totalorder %s100, %s102
      %p109 = scmp.eq.s32.totalorder %s24, 1
      %p110 = por %p108, %p109
      %p111 = scmp.ne.s32.totalorder %s102, %s103
      %p112 = scmp.eq.s32.totalorder %s24, 0
      %p113 = por %p111, %p112
      %p114 = scmp.ne.s32.totalorder %s102, %s103
      %p115 = scmp.eq.s32.totalorder %s25, 1
      %p116 = por %p114, %p115
      %p118 = scmp.ne.s32.totalorder %s103, %s117
      %p119 = scmp.eq.s32.totalorder %s25, 0
      %p120 = por %p118, %p119
      %s122 = sadd.s32 %s121, 1
      %p125 = scmp.eq.s32.totalorder %s19, 1
      %p126 = scmp.ne.s32.totalorder %s121, %s123
      %p127 = scmp.eq.s32.totalorder %s19, 0
      %p128 = por %p126, %p127
      %p129 = scmp.ne.s32.totalorder %s121, %s123
      %p130 = scmp.eq.s32.totalorder %s24, 1
      %p131 = por %p129, %p130
      %p132 = scmp.ne.s32.totalorder %s123, %s124
      %p133 = scmp.eq.s32.totalorder %s24, 0
      %p134 = por %p132, %p133
      %p135 = scmp.ne.s32.totalorder %s123, %s124
      %p136 = scmp.eq.s32.totalorder %s25, 1
      %p137 = por %p135, %p136
      %p139 = scmp.ne.s32.totalorder %s124, %s138
      %p140 = scmp.eq.s32.totalorder %s25, 0
      %p141 = por %p139, %p140
      %s142 = ssub.s32 %s19, %s26
      %p143 = scmp.eq.s32.totalorder %s142, 0
      %s145 = sadd.s32 %s144, 1
      %s146 = scalar_select %p143, %s144, %s145
      %p149 = pneg %p143
      %p150 = scmp.eq.s32.totalorder %s19, 1
      %p151 = por %p149, %p150
      %p152 = scmp.ne.s32.totalorder %s144, %s147
      %p153 = scmp.eq.s32.totalorder %s19, 0
      %p154 = por %p152, %p153
      %p155 = scmp.ne.s32.totalorder %s144, %s147
      %p156 = scmp.eq.s32.totalorder %s24, 1
      %p157 = por %p155, %p156
      %p158 = scmp.ne.s32.totalorder %s147, %s148
      %p159 = scmp.eq.s32.totalorder %s24, 0
      %p160 = por %p158, %p159
      %p161 = scmp.ne.s32.totalorder %s147, %s148
      %p162 = scmp.eq.s32.totalorder %s25, 1
      %p163 = por %p161, %p162
      %p165 = scmp.ne.s32.totalorder %s148, %s164
      %p166 = scmp.eq.s32.totalorder %s25, 0
      %p167 = por %p165, %p166
      %p168 = scmp.le.s32.totalorder 1, %s19
      %p169 = scmp.lt.s32.totalorder %s19, 3
      %p170 = pnand %p168, %p169
      %p171 = pneg %p170
      // Predicated region
      $region9: #{tpu_custom_call.1} parent=5 // pred_check
        _
      $region10: #{tpu_custom_call.1} parent=5 // pred_check_branch
        %173 = sbr.rel (%p170) target = $region12
      $region11: #{tpu_custom_call.1} parent=5 // pred_region
        %s174 = ssub.s32 %s19, 1
        // Predicated region
        $region13: #{tpu_custom_call.1} parent=11 // pred_check
          %p175 = pneg %p40
        $region14: #{tpu_custom_call.1} parent=11 // pred_check_branch
          %177 = sbr.rel (%p175) target = $region16
        $region15: #{tpu_custom_call.1} parent=11 // pred_region
          _
        $region16: #{tpu_custom_call.1} parent=11 // pred_fallthru
          _
        // Predicated region
        $region17: #{tpu_custom_call.1} parent=11 // pred_check
          %p178 = pneg %p113
        $region18: #{tpu_custom_call.1} parent=11 // pred_check_branch
          %180 = sbr.rel (%p178) target = $region20
        $region19: #{tpu_custom_call.1} parent=11 // pred_region
          %s182 = ssub.s32 512, 512
          %183 = vsyncadd [#allocation7], %s182
          %s184 = sshll.u32 [#allocation6], 4
          %s185 = int_to_ptr.vmem [resolvable:$true] %s184
          %190 = dma.hbm_to_vmem [thread:$0]  %s3, 512, %s185, [#allocation7], 128, 128, 8
        $region20: #{tpu_custom_call.1} parent=11 // pred_fallthru
          _
        // Predicated region
        $region21: #{tpu_custom_call.1} parent=11 // pred_check
          %p191 = pneg %p134
        $region22: #{tpu_custom_call.1} parent=11 // pred_check_branch
          %193 = sbr.rel (%p191) target = $region24
        $region23: #{tpu_custom_call.1} parent=11 // pred_region
          _
        $region24: #{tpu_custom_call.1} parent=11 // pred_fallthru
          _
      $region12: #{tpu_custom_call.1} parent=5 // pred_fallthru
        _
      %p194 = scmp.lt.s32.totalorder %s19, 2
      // Predicated region
      $region25: #{tpu_custom_call.1} parent=5 // pred_check
        %p195 = pneg %p194
      $region26: #{tpu_custom_call.1} parent=5 // pred_check_branch
        %197 = sbr.rel (%p195) target = $region28
      $region27: #{tpu_custom_call.1} parent=5 // pred_region
        // Predicated region
        $region29: #{tpu_custom_call.1} parent=27 // pred_check
          %p198 = pneg %p60
        $region30: #{tpu_custom_call.1} parent=27 // pred_check_branch
          %200 = sbr.rel (%p198) target = $region32
        $region31: #{tpu_custom_call.1} parent=27 // pred_region
          %s201 = sand.u32 %s50, 1
          %s202 = scalar_lea.sflag [#allocation4], %s201
          %s203 = sand.u32 %s50, 1
          %s204 = smul.addr %s203, 4
          %s205 = scalar_lea.vmem [#allocation3], %s204
          %s207 = ssub.s32 64, 64
          %208 = vsyncadd %s202, %s207
          %s209 = smul.addr %s19, 64
          %s210 = scalar_lea.hbm %s1, %s209
          %s212 = sshll.u32 %s205, 4
          %s213 = int_to_ptr.vmem [resolvable:$true] %s212
          %215 = dma.hbm_to_vmem [thread:$0]  %s210, 64, %s213, %s202
        $region32: #{tpu_custom_call.1} parent=27 // pred_fallthru
          _
        // Predicated region
        $region33: #{tpu_custom_call.1} parent=27 // pred_check
          %p216 = pneg %p86
        $region34: #{tpu_custom_call.1} parent=27 // pred_check_branch
          %218 = sbr.rel (%p216) target = $region36
        $region35: #{tpu_custom_call.1} parent=27 // pred_region
          %p219 = scmp.lt.s32.totalorder %s19, 1
          %s220 = scalar_select %p219, %s19, 1
          %s221 = scalar_lea.vmem %s2, %s220
        $region36: #{tpu_custom_call.1} parent=27 // pred_fallthru
          _
      $region28: #{tpu_custom_call.1} parent=5 // pred_fallthru
        _
      %p222 = scmp.le.s32.totalorder 1, %s19
      %p223 = scmp.lt.s32.totalorder %s19, 3
      %p224 = pnand %p222, %p223
      %p225 = pneg %p224
      // Predicated region
      $region37: #{tpu_custom_call.1} parent=5 // pred_check
        _
      $region38: #{tpu_custom_call.1} parent=5 // pred_check_branch
        %227 = sbr.rel (%p224) target = $region40
      $region39: #{tpu_custom_call.1} parent=5 // pred_region
        %s228 = ssub.s32 %s19, 1
        %s229 = sand.u32 %s53, 1
        %s230 = scalar_lea.sflag [#allocation4], %s229
        %s231 = sand.u32 %s53, 1
        %s232 = smul.addr %s231, 4
        %s233 = scalar_lea.vmem [#allocation3], %s232
        // Predicated region
        $region41: #{tpu_custom_call.1} parent=39 // pred_check
          %p234 = pneg %p66
        $region42: #{tpu_custom_call.1} parent=39 // pred_check_branch
          %236 = sbr.rel (%p234) target = $region44
        $region43: #{tpu_custom_call.1} parent=39 // pred_region
          %237 = dma.done %s230, 64
        $region44: #{tpu_custom_call.1} parent=39 // pred_fallthru
          _
        // Predicated region
        $region45: #{tpu_custom_call.1} parent=39 // pred_check
          %p238 = pneg %p113
        $region46: #{tpu_custom_call.1} parent=39 // pred_check_branch
          %240 = sbr.rel (%p238) target = $region48
        $region47: #{tpu_custom_call.1} parent=39 // pred_region
          %241 = dma.done [#allocation7], 512
        $region48: #{tpu_custom_call.1} parent=39 // pred_fallthru
          _
        %p242 = pneg %p40
        %p243 = pneg %p37
        %s244 = sand.u32 %s53, 1
        %s245 = scalar_lea.sflag [#allocation4], %s244
        %s246 = sand.u32 %s53, 1
        %s247 = smul.addr %s246, 4
        %s248 = scalar_lea.vmem [#allocation3], %s247
        %p249 = pneg %p66
        %p250 = pneg %p63
        %p251 = scmp.lt.s32.totalorder %s24, 1
        %s252 = scalar_select %p251, %s24, 1
        %s253 = scalar_lea.vmem %s2, %s252
        %p254 = pneg %p92
        %p255 = pneg %p89
        %p256 = pneg %p113
        %p257 = pneg %p110
        %p258 = pneg %p134
        %p259 = pneg %p131
        %p260 = pneg %p160
        %p261 = pneg %p157
        %s262 = sand.u32 %s147, 1
        %s263 = scalar_lea.sflag [#allocation5], %s262
        %s264 = sand.u32 %s147, 1
        %s265 = scalar_lea.vmem [#allocation8], %s264
        %p266 = scmp.lt.s32.totalorder %s24, 1
        %s267 = scalar_select %p266, %s24, 1
        %s268 = scalar_lea.vmem %s2, %s267
        %v269 = vld [vmem:[%s233] sm:$0xf]
        %v270 = vld [vmem:[%s268] sm:$0x1]
        %v271 = vld [vmem:[#allocation6] sm:$0xff]
        %v272 = vld [vmem:[#allocation6 + $0x8] sm:$0xff]
        %v273 = vld [vmem:[#allocation6 + $0x10] sm:$0xff]
        %v274 = vld [vmem:[#allocation6 + $0x18] sm:$0xff]
        %v275 = vld [vmem:[%s4] sm:$0x1]
        %v277 = vlaneseq
        %v278 = vshrl.u32 %v277, 7
        %v279 = vsub.s32 0, %v278
        %v280 = vrot.slane %v275, %v279
        %vm282 = vcmask 261120
        %v284 = vsel %vm282, %v269, 0
        %286 = vmatprep.subr.mxu0 0.0
        %287 = vmatpush1.msra.mxu0 0.0
        %288 = vmatprep.subr.mxu0 0.0
        %289 = vmatpush1.msra.mxu0 0.0
        %290 = vmatprep.subr.mxu0 0.0
        %291 = vmatpush1.msra.mxu0 0.0
        %292 = vmatprep.subr.mxu0 0.0
        %293 = vmatpush1.msra.mxu0 0.0
        %294 = vmatprep.subr.mxu0 0.0
        %295 = vmatpush1.msra.mxu0 0.0
        %296 = vmatprep.subr.mxu0 0.0
        %297 = vmatpush1.msra.mxu0 0.0
        %298 = vmatprep.subr.mxu0 0.0
        %299 = vmatpush1.msra.mxu0 0.0
        %300 = vmatprep.subr.mxu0 0.0
        %301 = vmatpush1.msra.mxu0 0.0
        %302 = vmatprep.subr.mxu0 0.0
        %303 = vmatpush1.msra.mxu0 0.0
        %304 = vmatprep.subr.mxu0 0.0
        %305 = vmatpush1.msra.mxu0 0.0
        %306 = vmatprep.subr.mxu0 0.0
        %307 = vmatpush1.msra.mxu0 0.0
        %308 = vmatprep.subr.mxu0 0.0
        %309 = vmatpush1.msra.mxu0 0.0
        %310 = vmatprep.subr.mxu0 0.0
        %311 = vmatpush1.msra.mxu0 %v274
        %312 = vmatprep.subr.mxu0 0.0
        %313 = vmatpush1.msra.mxu0 %v273
        %314 = vmatprep.subr.mxu0 0.0
        %315 = vmatpush1.msra.mxu0 %v272
        %316 = vmatprep.subr.mxu0 0.0
        %317 = vmatpush1.msra.mxu0 %v271
        %318 = vmatprep.subr.mxu0 0.0
        %319 = vmatpush2.msra.mxu0 0.0
        %320 = vmatprep.subr.mxu0 0.0
        %321 = vmatpush2.msra.mxu0 0.0
        %322 = vmatprep.subr.mxu0 0.0
        %323 = vmatpush2.msra.mxu0 0.0
        %324 = vmatprep.subr.mxu0 0.0
        %325 = vmatpush2.msra.mxu0 0.0
        %326 = vmatprep.subr.mxu0 0.0
        %327 = vmatpush2.msra.mxu0 0.0
        %328 = vmatprep.subr.mxu0 0.0
        %329 = vmatpush2.msra.mxu0 0.0
        %330 = vmatprep.subr.mxu0 0.0
        %331 = vmatpush2.msra.mxu0 0.0
        %332 = vmatprep.subr.mxu0 0.0
        %333 = vmatpush2.msra.mxu0 0.0
        %334 = vmatprep.subr.mxu0 0.0
        %335 = vmatpush2.msra.mxu0 0.0
        %336 = vmatprep.subr.mxu0 0.0
        %337 = vmatpush2.msra.mxu0 0.0
        %338 = vmatprep.subr.mxu0 0.0
        %339 = vmatpush2.msra.mxu0 0.0
        %340 = vmatprep.subr.mxu0 0.0
        %341 = vmatpush2.msra.mxu0 0.0
        %342 = vmatprep.subr.mxu0 0.0
        %343 = vmatpush2.msra.mxu0 0.0
        %344 = vmatprep.subr.mxu0 0.0
        %345 = vmatpush2.msra.mxu0 0.0
        %346 = vmatprep.subr.mxu0 0.0
        %347 = vmatpush2.msra.mxu0 0.0
        %348 = vmatprep.subr.mxu0 0.0
        %349 = vmatpush2.msra.mxu0 0.0
        %350 = vmatprep.mubr.f32.mxu0 0.0
        %351 = vmatmul.mubr.f32.gmra.mxu0 %v284
        %v352 = vpop.f32.mrf.mxu0
        %v353 = vadd.f32 %v280, %v352
        %v354 = vpop.f32.mrf.mxu0
        %355 = vdwg.mxu0
        %v356 = vmul.f32 %v353, %v353
        %vm357 = vcmask 257024
        %v358 = vsel %vm357, %v356, 0.0
        %359 = vadd.xlane.f32.xlu0 %v358
        %v360 = vpop.xlane.xlu0 %359
        %v361 = vrsqrt.pop %v360
        %v362 = vmul.f32 %v353, %v361
        %v363 = vmul.f32 %v270, %v270
        %vm364 = vcmask 253952
        %v365 = vsel %vm364, %v363, 0.0
        %366 = vadd.xlane.f32.xlu0 %v365
        %v367 = vpop.xlane.xlu0 %366
        %v368 = vrsqrt.pop %v367
        %v369 = vmul.f32 %v270, %v368
        %s370 = sld [smem:[#allocation2]]
        %v372 = vsel %vm282, %v369, 0
        %v375 = vsel %vm282, %v362, 0
        %377 = vmatprep.subr.mxu0 0.0
        %378 = vmatpush1.xpose.msra.mxu0 0.0
        %379 = vmatprep.subr.mxu0 0.0
        %380 = vmatpush1.xpose.msra.mxu0 0.0
        %381 = vmatprep.subr.mxu0 0.0
        %382 = vmatpush1.xpose.msra.mxu0 0.0
        %383 = vmatprep.subr.mxu0 0.0
        %384 = vmatpush1.xpose.msra.mxu0 0.0
        %385 = vmatprep.subr.mxu0 0.0
        %386 = vmatpush1.xpose.msra.mxu0 0.0
        %387 = vmatprep.subr.mxu0 0.0
        %388 = vmatpush1.xpose.msra.mxu0 0.0
        %389 = vmatprep.subr.mxu0 0.0
        %390 = vmatpush1.xpose.msra.mxu0 0.0
        %391 = vmatprep.subr.mxu0 0.0
        %392 = vmatpush1.xpose.msra.mxu0 0.0
        %393 = vmatprep.subr.mxu0 0.0
        %394 = vmatpush1.xpose.msra.mxu0 0.0
        %395 = vmatprep.subr.mxu0 0.0
        %396 = vmatpush1.xpose.msra.mxu0 0.0
        %397 = vmatprep.subr.mxu0 0.0
        %398 = vmatpush1.xpose.msra.mxu0 0.0
        %399 = vmatprep.subr.mxu0 0.0
        %400 = vmatpush1.xpose.msra.mxu0 0.0
        %401 = vmatprep.subr.mxu0 0.0
        %402 = vmatpush1.xpose.msra.mxu0 0.0
        %403 = vmatprep.subr.mxu0 0.0
        %404 = vmatpush1.xpose.msra.mxu0 0.0
        %405 = vmatprep.subr.mxu0 0.0
        %406 = vmatpush1.xpose.msra.mxu0 0.0
        %407 = vmatprep.subr.mxu0 0.0
        %408 = vmatpush1.xpose.msra.mxu0 %v375
        %409 = vmatprep.subr.mxu0 0.0
        %410 = vmatpush2.xpose.msra.mxu0 0.0
        %411 = vmatprep.subr.mxu0 0.0
        %412 = vmatpush2.xpose.msra.mxu0 0.0
        %413 = vmatprep.subr.mxu0 0.0
        %414 = vmatpush2.xpose.msra.mxu0 0.0
        %415 = vmatprep.subr.mxu0 0.0
        %416 = vmatpush2.xpose.msra.mxu0 0.0
        %417 = vmatprep.subr.mxu0 0.0
        %418 = vmatpush2.xpose.msra.mxu0 0.0
        %419 = vmatprep.subr.mxu0 0.0
        %420 = vmatpush2.xpose.msra.mxu0 0.0
        %421 = vmatprep.subr.mxu0 0.0
        %422 = vmatpush2.xpose.msra.mxu0 0.0
        %423 = vmatprep.subr.mxu0 0.0
        %424 = vmatpush2.xpose.msra.mxu0 0.0
        %425 = vmatprep.subr.mxu0 0.0
        %426 = vmatpush2.xpose.msra.mxu0 0.0
        %427 = vmatprep.subr.mxu0 0.0
        %428 = vmatpush2.xpose.msra.mxu0 0.0
        %429 = vmatprep.subr.mxu0 0.0
        %430 = vmatpush2.xpose.msra.mxu0 0.0
        %431 = vmatprep.subr.mxu0 0.0
        %432 = vmatpush2.xpose.msra.mxu0 0.0
        %433 = vmatprep.subr.mxu0 0.0
        %434 = vmatpush2.xpose.msra.mxu0 0.0
        %435 = vmatprep.subr.mxu0 0.0
        %436 = vmatpush2.xpose.msra.mxu0 0.0
        %437 = vmatprep.subr.mxu0 0.0
        %438 = vmatpush2.xpose.msra.mxu0 0.0
        %439 = vmatprep.subr.mxu0 0.0
        %440 = vmatpush2.xpose.msra.mxu0 0.0
        %441 = vmatprep.mubr.f32.mxu0 0.0
        %442 = vmatmul.mubr.f32.gmra.mxu0 %v372
        %v443 = vpop.f32.mrf.mxu0
        %v444 = vadd.f32 0.0, %v443
        %v445 = vpop.f32.mrf.mxu0
        %446 = vdwg.mxu0
        %v447 = vstv %s370
        %v448 = vmul.f32 %v447, %v444
        %vm449 = vcmask 24576
        %450 = vst.msk [vmem:[%s265] sm:$0x1] %vm449, %v448
        %s451 = sand.u32 %s147, 1
        %s452 = scalar_lea.sflag [#allocation5], %s451
        %s453 = sand.u32 %s147, 1
        %s454 = scalar_lea.vmem [#allocation8], %s453
        // Predicated region
        $region49: #{tpu_custom_call.1} parent=39 // pred_check
          %p455 = pneg %p157
        $region50: #{tpu_custom_call.1} parent=39 // pred_check_branch
          %457 = sbr.rel (%p455) target = $region52
        $region51: #{tpu_custom_call.1} parent=39 // pred_region
          %s459 = ssub.s32 16, 16
          %460 = vsyncadd %s452, %s459
          %s461 = smul.addr %s24, 16
          %s462 = scalar_lea.hbm %s5, %s461
          %s464 = sshll.u32 %s454, 4
          %s465 = int_to_ptr.vmem [resolvable:$true] %s464
          %467 = dma.vmem_to_hbm [thread:$0]  %s465, 16, %s462, %s452
        $region52: #{tpu_custom_call.1} parent=39 // pred_fallthru
          _
      $region40: #{tpu_custom_call.1} parent=5 // pred_fallthru
        _
      %p468 = scmp.le.s32.totalorder 2, %s19
      // Predicated region
      $region53: #{tpu_custom_call.1} parent=5 // pred_check
        %p469 = pneg %p468
      $region54: #{tpu_custom_call.1} parent=5 // pred_check_branch
        %471 = sbr.rel (%p469) target = $region56
      $region55: #{tpu_custom_call.1} parent=5 // pred_region
        %s472 = ssub.s32 %s19, 2
        // Predicated region
        $region57: #{tpu_custom_call.1} parent=55 // pred_check
          %p473 = pneg %p163
        $region58: #{tpu_custom_call.1} parent=55 // pred_check_branch
          %475 = sbr.rel (%p473) target = $region60
        $region59: #{tpu_custom_call.1} parent=55 // pred_region
          %s476 = sand.u32 %s148, 1
          %s477 = scalar_lea.sflag [#allocation5], %s476
          %s478 = sand.u32 %s148, 1
          %s479 = scalar_lea.vmem [#allocation8], %s478
          %480 = dma.done %s477, 16
        $region60: #{tpu_custom_call.1} parent=55 // pred_fallthru
          _
      $region56: #{tpu_custom_call.1} parent=5 // pred_fallthru
        _
    $region6: #{tpu_custom_call.1} parent=1 // loop_footer
      %s23 = sadd.s32 1, %s19
    $region7: #{tpu_custom_call.1} parent=1 // loop_footer_branch
      %18 = sbr.rel target = $region3
    $region8: #{tpu_custom_call.1} parent=1 // loop_exit
      _
    %481 = vsyncpa [#allocation4], 1
    %s482 = scalar_lea.sflag [#allocation4], 1
    %483 = vsyncpa %s482, 1
    %484 = vsyncpa [#allocation7], 1
    %485 = vsyncpa [#allocation5], 1
    %s486 = scalar_lea.sflag [#allocation5], 1
    %487 = vsyncpa %s486, 1

</llo_original>
